<compile_context>
chip_gen: v7x
topology: tpu7x:2x2x1
jax: 0.10.0
libtpu: 0.0.40
codegen_flags: <defaults>
</compile_context>

<pallas_src>
import functools

import jax
import jax.numpy as jnp
from jax.experimental import pallas as pl
from jax.experimental.pallas import tpu as pltpu

_SUBLANE = 8
_DEFAULT_BLOCK_B = 2048
_MAX_TILE_BYTES = 4 * 1024 * 1024  # per x/out tile buffer (double-buffered by Pallas)


def _stn_nn_kernel(x_ref, w1_ref, b1_ref, w2_ref, b2_ref, o_ref):
    # x_ref:  (TB, D)   current batch tile (f32 or bf16)
    # w1_ref: (D,  H)   enc.weight, pre-transposed to NN layout (f32 or bf16)
    # b1_ref: (1,  H)   enc.bias (f32)
    # w2_ref: (H,  D)   dec.weight, pre-transposed to NN layout (f32 or bf16)
    # b2_ref: (1,  D)   dec.bias (f32)
    x = x_ref[...].astype(w1_ref.dtype)  # in-kernel cast (no-op for f32 weights)

    # enc: h = relu(x @ W1t + b1); MXU matmul with f32 accumulate, bias/ReLU in f32.
    h = jnp.dot(x, w1_ref[...], preferred_element_type=jnp.float32)
    h = jnp.maximum(h + b1_ref[...], 0.0)

    # dec: out = h @ W2t + b2
    out = jnp.dot(h.astype(w2_ref.dtype), w2_ref[...],
                  preferred_element_type=jnp.float32)
    o_ref[...] = (out + b2_ref[...]).astype(o_ref.dtype)


def prepare_stn_nn_params(params, use_bf16=False):
    """One-time parameter preparation (do this at init / after each param update).

    params: dict with enc_w (H, D), enc_b (H,), dec_w (D, H), dec_b (D,) in the
            PyTorch nn.Linear convention (weight is (out_features, in_features)).
    Returns weights transposed to NN layout (so the kernel needs no in-kernel
    transpose), optionally cast to bf16, and biases reshaped to (1, X) f32.
    """
    wdt = jnp.bfloat16 if use_bf16 else jnp.float32
    return {
        "w1_t": jnp.asarray(params["enc_w"]).T.astype(wdt),            # (D, H)
        "b1": jnp.asarray(params["enc_b"]).reshape(1, -1).astype(jnp.float32),
        "w2_t": jnp.asarray(params["dec_w"]).T.astype(wdt),            # (H, D)
        "b2": jnp.asarray(params["dec_b"]).reshape(1, -1).astype(jnp.float32),
    }


@functools.partial(jax.jit, static_argnames=("shift_or_scale", "block_b", "out_dtype"))
def stn_nn_forward(inputs, prepared, shift_or_scale="shift", block_b=None,
                   out_dtype=None):
    """Pallas implementation of Stn_NN.forward.

    inputs:   (B, erm_input_dim) float32 (or bfloat16)
    prepared: output of prepare_stn_nn_params()
    out_dtype: output dtype (defaults to inputs.dtype; pass jnp.bfloat16 to halve
               output HBM traffic when weights are bf16).
    """
    if shift_or_scale not in ("shift", "scale"):
        raise ValueError("shift_or_scale must be 'shift' or 'scale'")
    # Both branches run the same layer_blocks, exactly like the reference module.

    B, D = inputs.shape
    w1_t, b1, w2_t, b2 = prepared["w1_t"], prepared["b1"], prepared["w2_t"], prepared["b2"]
    H = w1_t.shape[1]
    out_dt = inputs.dtype if out_dtype is None else jnp.dtype(out_dtype)

    # Batch tile: big enough to amortize the ~0.35 us/step pipeline overhead, but
    # capped so each x/out tile stays <= ~4 MiB (fits v5e/v6e/v7x scoped VMEM with
    # double-buffering and leaves headroom).
    bytes_per_row = max(D, 1) * 4
    cap_rows = max(_SUBLANE, ((_MAX_TILE_BYTES // bytes_per_row) // _SUBLANE) * _SUBLANE)
    tb = _DEFAULT_BLOCK_B if block_b is None else int(block_b)
    tb = min(tb, cap_rows)
    if tb >= B:
        tb = B                                           # full-extent block (always legal)
    else:
        tb = max(_SUBLANE, (tb // _SUBLANE) * _SUBLANE)  # sublane multiple; tail block clipped

    grid = (pl.cdiv(B, tb),)

    itemsize = jnp.dtype(inputs.dtype).itemsize
    cost = pl.CostEstimate(
        flops=4 * B * D * H,   # two matmuls, 2*B*D*H FLOPs each
        transcendentals=0,
        bytes_accessed=(B * D * itemsize                       # x read
                        + B * D * jnp.dtype(out_dt).itemsize   # out write
                        + w1_t.size * jnp.dtype(w1_t.dtype).itemsize
                        + w2_t.size * jnp.dtype(w2_t.dtype).itemsize
                        + b1.size * 4 + b2.size * 4),
    )

    out = pl.pallas_call(
        _stn_nn_kernel,
        out_shape=jax.ShapeDtypeStruct((B, D), out_dt),
        grid_spec=pl.GridSpec(
            grid=grid,
            in_specs=[
                pl.BlockSpec((tb, D), lambda i: (i, 0)),   # x tile (pipelined)
                pl.BlockSpec((D, H), lambda i: (0, 0)),    # enc weight (resident)
                pl.BlockSpec((1, H), lambda i: (0, 0)),    # enc bias
                pl.BlockSpec((H, D), lambda i: (0, 0)),    # dec weight (resident)
                pl.BlockSpec((1, D), lambda i: (0, 0)),    # dec bias
            ],
            out_specs=pl.BlockSpec((tb, D), lambda i: (i, 0)),
        ),
        compiler_params=pltpu.CompilerParams(
            dimension_semantics=("parallel",),   # shards batch steps across v7x cores
            vmem_limit_bytes=32 * 1024 * 1024,   # fits v5e/v6e/v7x scoped VMEM
        ),
        cost_estimate=cost,
    )(inputs, w1_t, b1, w2_t, b2)

    return out


def init_stn_nn_params(key, erm_input_dim, hidden_dim, dtype=jnp.float32):
    """Deterministic init mimicking PyTorch nn.Linear default U(-1/sqrt(fan_in), +)."""
    k1, k2, k3, k4 = jax.random.split(key, 4)
    bound_enc = 1.0 / (erm_input_dim ** 0.5)
    bound_dec = 1.0 / (hidden_dim ** 0.5)
    return {
        "enc_w": jax.random.uniform(k1, (hidden_dim, erm_input_dim), dtype,
                                    minval=-bound_enc, maxval=bound_enc),
        "enc_b": jax.random.uniform(k2, (hidden_dim,), dtype,
                                    minval=-bound_enc, maxval=bound_enc),
        "dec_w": jax.random.uniform(k3, (erm_input_dim, hidden_dim), dtype,
                                    minval=-bound_dec, maxval=bound_dec),
        "dec_b": jax.random.uniform(k4, (erm_input_dim,), dtype,
                                    minval=-bound_dec, maxval=bound_dec),
    }


def _reference(x, params):
    h = jnp.maximum(x @ params["enc_w"].T + params["enc_b"], 0.0)
    return h @ params["dec_w"].T + params["dec_b"]


if __name__ == "__main__":
    erm_input_dim = 16
    hidden_dim = 32
    batch = 8

    key = jax.random.PRNGKey(0)
    pkey, xkey, x2key, x3key = jax.random.split(key, 4)
    params = init_stn_nn_params(pkey, erm_input_dim, hidden_dim)
    prep_f32 = prepare_stn_nn_params(params)                 # one-time weight prep
    prep_bf16 = prepare_stn_nn_params(params, use_bf16=True)

    x = jax.random.normal(xkey, (batch, erm_input_dim), dtype=jnp.float32)
    ref = _reference(x, params)

    # f32 path ('shift'): single full-extent batch block.
    out = jax.block_until_ready(stn_nn_forward(x, prep_f32, shift_or_scale="shift"))
    assert out.shape == (batch, erm_input_dim)
    assert jnp.allclose(out, ref, atol=1e-5, rtol=1e-5)

    # 'scale' branch is identical to 'shift' in the reference module.
    out2 = jax.block_until_ready(stn_nn_forward(x, prep_f32, shift_or_scale="scale"))
    assert jnp.allclose(out2, ref, atol=1e-5, rtol=1e-5)

    # Batch not a multiple of the tile -> exercises the clipped tail block (no padding pass).
    x_odd = jax.random.normal(x2key, (20, erm_input_dim), dtype=jnp.float32)
    out_odd = jax.block_until_ready(
        stn_nn_forward(x_odd, prep_f32, shift_or_scale="shift", block_b=16))
    assert out_odd.shape == (20, erm_input_dim)
    assert jnp.allclose(out_odd, _reference(x_odd, params), atol=1e-5, rtol=1e-5)

    # Larger batch -> multi-step grid (pipelining / v7x megacore sharding path).
    x_big = jax.random.normal(x3key, (4096, erm_input_dim), dtype=jnp.float32)
    out_big = jax.block_until_ready(stn_nn_forward(x_big, prep_f32, shift_or_scale="shift"))
    assert out_big.shape == (4096, erm_input_dim)
    assert jnp.allclose(out_big, _reference(x_big, params), atol=1e-4, rtol=1e-4)

    # bf16 MXU operands (x cast inside the kernel, f32 accumulate) -> looser tolerance.
    out_bf16 = jax.block_until_ready(stn_nn_forward(x, prep_bf16, shift_or_scale="shift"))
    assert jnp.allclose(out_bf16, ref, atol=5e-2, rtol=5e-2)

    # bf16 output dtype (halves output HBM traffic).
    out_bf16_o = jax.block_until_ready(
        stn_nn_forward(x, prep_bf16, shift_or_scale="shift", out_dtype=jnp.bfloat16))
    assert out_bf16_o.dtype == jnp.bfloat16
    assert jnp.allclose(out_bf16_o.astype(jnp.float32), ref, atol=5e-2, rtol=5e-2)

    print("KERNEL_OK")
</pallas_src>

<mosaic_0001>
module attributes {stable_mosaic.version = 11 : i64} {
  func.func @_stn_nn_kernel(%arg0: i32, %arg1: memref<8x16xf32, #tpu.memory_space<vmem>>, %arg2: memref<16x32xf32, #tpu.memory_space<vmem>>, %arg3: memref<1x32xf32, #tpu.memory_space<vmem>>, %arg4: memref<32x16xf32, #tpu.memory_space<vmem>>, %arg5: memref<1x16xf32, #tpu.memory_space<vmem>>, %arg6: memref<8x16xf32, #tpu.memory_space<vmem>>) attributes {dimension_semantics = [#tpu.dimension_semantics<parallel>], iteration_bounds = array<i64: 1>, scalar_prefetch = 0 : i64, scratch_operands = 0 : i64, tpu.core_type = #tpu.core_type<tc>, window_params = [{transform_indices = @transform_0, window_bounds = array<i64: 8, 16>}, {pipeline_mode = #tpu.pipeline_mode<synchronous>, transform_indices = @transform_1, window_bounds = array<i64: 16, 32>}, {pipeline_mode = #tpu.pipeline_mode<synchronous>, transform_indices = @transform_2, window_bounds = array<i64: 1, 32>}, {pipeline_mode = #tpu.pipeline_mode<synchronous>, transform_indices = @transform_3, window_bounds = array<i64: 32, 16>}, {pipeline_mode = #tpu.pipeline_mode<synchronous>, transform_indices = @transform_4, window_bounds = array<i64: 1, 16>}, {transform_indices = @transform_5, window_bounds = array<i64: 8, 16>}]} {
    %c0 = arith.constant 0 : index
    %c0_0 = arith.constant 0 : index
    %0 = vector.load %arg1[%c0, %c0_0] : memref<8x16xf32, #tpu.memory_space<vmem>>, vector<8x16xf32>
    %c0_1 = arith.constant 0 : index
    %c0_2 = arith.constant 0 : index
    %1 = vector.load %arg2[%c0_1, %c0_2] : memref<16x32xf32, #tpu.memory_space<vmem>>, vector<16x32xf32>
    %cst = arith.constant dense<0.000000e+00> : vector<8x32xf32>
    %2 = tpu.matmul %0, %1, %cst {dimension_numbers = #tpu.dot_dimension_numbers<[1], [0], [0], [1], [0, 0, 1, 1], [], []>} : vector<8x16xf32>, vector<16x32xf32>, vector<8x32xf32> -> vector<8x32xf32>
    %c0_3 = arith.constant 0 : index
    %c0_4 = arith.constant 0 : index
    %3 = vector.load %arg3[%c0_3, %c0_4] : memref<1x32xf32, #tpu.memory_space<vmem>>, vector<1x32xf32>
    %4 = vector.broadcast %3 : vector<1x32xf32> to vector<8x32xf32>
    %5 = arith.addf %2, %4 : vector<8x32xf32>
    %cst_5 = arith.constant 0.000000e+00 : f32
    %6 = vector.broadcast %cst_5 : f32 to vector<8x32xf32>
    %7 = arith.maximumf %5, %6 : vector<8x32xf32>
    %c0_6 = arith.constant 0 : index
    %c0_7 = arith.constant 0 : index
    %8 = vector.load %arg4[%c0_6, %c0_7] : memref<32x16xf32, #tpu.memory_space<vmem>>, vector<32x16xf32>
    %cst_8 = arith.constant dense<0.000000e+00> : vector<8x16xf32>
    %9 = tpu.matmul %7, %8, %cst_8 {dimension_numbers = #tpu.dot_dimension_numbers<[1], [0], [0], [1], [0, 0, 1, 1], [], []>} : vector<8x32xf32>, vector<32x16xf32>, vector<8x16xf32> -> vector<8x16xf32>
    %c0_9 = arith.constant 0 : index
    %c0_10 = arith.constant 0 : index
    %10 = vector.load %arg5[%c0_9, %c0_10] : memref<1x16xf32, #tpu.memory_space<vmem>>, vector<1x16xf32>
    %11 = vector.broadcast %10 : vector<1x16xf32> to vector<8x16xf32>
    %12 = arith.addf %9, %11 : vector<8x16xf32>
    %c0_11 = arith.constant 0 : index
    %c0_12 = arith.constant 0 : index
    %13 = vector.load %arg6[%c0_11, %c0_12] : memref<8x16xf32, #tpu.memory_space<vmem>>, vector<8x16xf32>
    tpu.vector_store %arg6[%c0_11, %c0_12], %12 {strides = array<i32>} : memref<8x16xf32, #tpu.memory_space<vmem>>, vector<8x16xf32>,
    return
  }
  func.func @transform_0(%arg0: i32) -> (i32, i32) {
    %c0_i32 = arith.constant 0 : i32
    %c0_i32_0 = arith.constant 0 : i32
    return %arg0, %c0_i32 : i32, i32
  }
  func.func @transform_1(%arg0: i32) -> (i32, i32) {
    %c0_i32 = arith.constant 0 : i32
    %c0_i32_0 = arith.constant 0 : i32
    %c0_i32_1 = arith.constant 0 : i32
    return %c0_i32, %c0_i32_0 : i32, i32
  }
  func.func @transform_2(%arg0: i32) -> (i32, i32) {
    %c0_i32 = arith.constant 0 : i32
    %c0_i32_0 = arith.constant 0 : i32
    %c0_i32_1 = arith.constant 0 : i32
    return %c0_i32, %c0_i32_0 : i32, i32
  }
  func.func @transform_3(%arg0: i32) -> (i32, i32) {
    %c0_i32 = arith.constant 0 : i32
    %c0_i32_0 = arith.constant 0 : i32
    %c0_i32_1 = arith.constant 0 : i32
    return %c0_i32, %c0_i32_0 : i32, i32
  }
  func.func @transform_4(%arg0: i32) -> (i32, i32) {
    %c0_i32 = arith.constant 0 : i32
    %c0_i32_0 = arith.constant 0 : i32
    %c0_i32_1 = arith.constant 0 : i32
    return %c0_i32, %c0_i32_0 : i32, i32
  }
  func.func @transform_5(%arg0: i32) -> (i32, i32) {
    %c0_i32 = arith.constant 0 : i32
    %c0_i32_0 = arith.constant 0 : i32
    return %arg0, %c0_i32 : i32, i32
  }
}

</mosaic_0001>

<llo_original>
// kernel: stn_nn_forward.1
$region0: #{stn_nn_forward.1}
  #allocation0 [shape = 'u32[]', space=smem, size = 0x4, offset = 0x4, fixed_abs, tag = 'smem constant byte address 0x4 - core index']
  #allocation1 [shape = 'u32[144,128]{1,0:T(1,128)}', space=vmem, size = 0x12000, scoped, tag = 'internal scratch']
  %s0 = inlined_call_operand.vmem [shape: f32[8,16], index: 0, kind: input, shape index: {}]
  %s1 = inlined_call_operand.vmem [shape: f32[16,32], index: 1, kind: input, shape index: {}]
  %s2 = inlined_call_operand.vmem [shape: f32[1,32], index: 2, kind: input, shape index: {}]
  %s3 = inlined_call_operand.vmem [shape: f32[32,16], index: 3, kind: input, shape index: {}]
  %s4 = inlined_call_operand.vmem [shape: f32[1,16], index: 4, kind: input, shape index: {}]
  %s5 = inlined_call_operand.hbm [shape: f32[8,16], index: 5, kind: output, shape index: {}]
  %s6 = sld [smem:[#allocation0]]
  $region30: #{stn_nn_forward.1} parent=0
    _
  %s8 = ssub.s32 1, %s6
  %s9 = scalar_select 0, %s8, %s6
  $region1: #{stn_nn_forward.1} parent=0
    #allocation2 [shape = 'u8[4096]{0}', space=vmem, size = 0x1000, scoped, tag = 'output window, operand 0, single buffered']
    #allocation3 [shape = 's32[1]{0}', space=sflag, size = 0x4, scoped, tag = 'scoped memory for stn_nn_forward.1']
    %10 = vsyncpa [#allocation3], 0
    // Predicated region
    $region2: #{stn_nn_forward.1} parent=1 // pred_check
      _
    $region3: #{stn_nn_forward.1} parent=1 // pred_check_branch
      %12 = sbr.rel (0) target = $region5
    $region4: #{stn_nn_forward.1} parent=1 // pred_region
      _
    $region5: #{stn_nn_forward.1} parent=1 // pred_fallthru
      _
    // Predicated region
    $region6: #{stn_nn_forward.1} parent=1 // pred_check
      _
    $region7: #{stn_nn_forward.1} parent=1 // pred_check_branch
      %14 = sbr.rel (0) target = $region9
    $region8: #{stn_nn_forward.1} parent=1 // pred_region
      _
    $region9: #{stn_nn_forward.1} parent=1 // pred_fallthru
      _
    // Predicated region
    $region10: #{stn_nn_forward.1} parent=1 // pred_check
      _
    $region11: #{stn_nn_forward.1} parent=1 // pred_check_branch
      %16 = sbr.rel (0) target = $region13
    $region12: #{stn_nn_forward.1} parent=1 // pred_region
      _
    $region13: #{stn_nn_forward.1} parent=1 // pred_fallthru
      _
    // Predicated region
    $region14: #{stn_nn_forward.1} parent=1 // pred_check
      _
    $region15: #{stn_nn_forward.1} parent=1 // pred_check_branch
      %18 = sbr.rel (0) target = $region17
    $region16: #{stn_nn_forward.1} parent=1 // pred_region
      _
    $region17: #{stn_nn_forward.1} parent=1 // pred_fallthru
      _
    // Predicated region
    $region18: #{stn_nn_forward.1} parent=1 // pred_check
      _
    $region19: #{stn_nn_forward.1} parent=1 // pred_check_branch
      %20 = sbr.rel (0) target = $region21
    $region20: #{stn_nn_forward.1} parent=1 // pred_region
      _
    $region21: #{stn_nn_forward.1} parent=1 // pred_fallthru
      _
    %v21 = vld [vmem:[%s0] sm:$0xff]
    %v22 = vld [vmem:[%s1] sm:$0xff]
    %v23 = vld [vmem:[%s1 + $0x8] sm:$0xff]
    %v24 = vld [vmem:[%s2] sm:$0x1]
    %v26 = vlaneseq
    %v27 = vshrl.u32 %v26, 7
    %v28 = vsub.s32 0, %v27
    %v29 = vrot.slane %v24, %v28
    %vm31 = vcmask 130048
    %v33 = vsel %vm31, %v21, 0
    %35 = vmatprep.subr.mxu0 0.0
    %36 = vmatpush1.msra.mxu0 %v22
    %37 = vmatprep.subr.mxu0 0.0
    %38 = vmatpush1.msra.mxu0 %v23
    %39 = vmatprep.subr.mxu0 0.0
    %40 = vmatpush1.msra.mxu0 0.0
    %41 = vmatprep.subr.mxu0 0.0
    %42 = vmatpush1.msra.mxu0 0.0
    %43 = vmatprep.subr.mxu0 0.0
    %44 = vmatpush1.msra.mxu0 0.0
    %45 = vmatprep.subr.mxu0 0.0
    %46 = vmatpush1.msra.mxu0 0.0
    %47 = vmatprep.subr.mxu0 0.0
    %48 = vmatpush1.msra.mxu0 0.0
    %49 = vmatprep.subr.mxu0 0.0
    %50 = vmatpush1.msra.mxu0 0.0
    %51 = vmatprep.subr.mxu0 0.0
    %52 = vmatpush1.msra.mxu0 0.0
    %53 = vmatprep.subr.mxu0 0.0
    %54 = vmatpush1.msra.mxu0 0.0
    %55 = vmatprep.subr.mxu0 0.0
    %56 = vmatpush1.msra.mxu0 0.0
    %57 = vmatprep.subr.mxu0 0.0
    %58 = vmatpush1.msra.mxu0 0.0
    %59 = vmatprep.subr.mxu0 0.0
    %60 = vmatpush1.msra.mxu0 0.0
    %61 = vmatprep.subr.mxu0 0.0
    %62 = vmatpush1.msra.mxu0 0.0
    %63 = vmatprep.subr.mxu0 0.0
    %64 = vmatpush1.msra.mxu0 0.0
    %65 = vmatprep.subr.mxu0 0.0
    %66 = vmatpush1.msra.mxu0 0.0
    %67 = vmatprep.subr.mxu0 0.0
    %68 = vmatpush1.msra.mxu0 0.0
    %69 = vmatprep.subr.mxu0 0.0
    %70 = vmatpush1.msra.mxu0 0.0
    %71 = vmatprep.subr.mxu0 0.0
    %72 = vmatpush1.msra.mxu0 0.0
    %73 = vmatprep.subr.mxu0 0.0
    %74 = vmatpush1.msra.mxu0 0.0
    %75 = vmatprep.subr.mxu0 0.0
    %76 = vmatpush1.msra.mxu0 0.0
    %77 = vmatprep.subr.mxu0 0.0
    %78 = vmatpush1.msra.mxu0 0.0
    %79 = vmatprep.subr.mxu0 0.0
    %80 = vmatpush1.msra.mxu0 0.0
    %81 = vmatprep.subr.mxu0 0.0
    %82 = vmatpush1.msra.mxu0 0.0
    %83 = vmatprep.subr.mxu0 0.0
    %84 = vmatpush1.msra.mxu0 0.0
    %85 = vmatprep.subr.mxu0 0.0
    %86 = vmatpush1.msra.mxu0 0.0
    %87 = vmatprep.subr.mxu0 0.0
    %88 = vmatpush1.msra.mxu0 0.0
    %89 = vmatprep.subr.mxu0 0.0
    %90 = vmatpush1.msra.mxu0 0.0
    %91 = vmatprep.subr.mxu0 0.0
    %92 = vmatpush1.msra.mxu0 0.0
    %93 = vmatprep.subr.mxu0 0.0
    %94 = vmatpush1.msra.mxu0 0.0
    %95 = vmatprep.subr.mxu0 0.0
    %96 = vmatpush1.msra.mxu0 0.0
    %97 = vmatprep.subr.mxu0 0.0
    %98 = vmatpush1.msra.mxu0 0.0
    %99 = vmatprep.mubr.f32.mxu0 0.0
    %100 = vmatmul.mubr.f32.gmra.mrb[0].mxu0 %v33
    %v101 = vpop.f32.mrb[0].mxu0
    %v102 = vadd.f32 %v29, %v101
    %v103 = vpop.f32.mrb[0].mxu0
    %104 = vdwg.mxu0
    %v105 = vmax.f32 %v102, 0.0
    %v106 = vld [vmem:[%s3] sm:$0xff]
    %v107 = vld [vmem:[%s3 + $0x8] sm:$0xff]
    %v108 = vld [vmem:[%s3 + $0x10] sm:$0xff]
    %v109 = vld [vmem:[%s3 + $0x18] sm:$0xff]
    %v110 = vld [vmem:[%s4] sm:$0x1]
    %v112 = vlaneseq
    %v113 = vshrl.u32 %v112, 7
    %v114 = vsub.s32 0, %v113
    %v115 = vrot.slane %v110, %v114
    %vm117 = vcmask 261120
    %v119 = vsel %vm117, %v105, 0
    %121 = vmatprep.subr.mxu0 0.0
    %122 = vmatpush1.msra.mxu0 %v106
    %123 = vmatprep.subr.mxu0 0.0
    %124 = vmatpush1.msra.mxu0 %v107
    %125 = vmatprep.subr.mxu0 0.0
    %126 = vmatpush1.msra.mxu0 %v108
    %127 = vmatprep.subr.mxu0 0.0
    %128 = vmatpush1.msra.mxu0 %v109
    %129 = vmatprep.subr.mxu0 0.0
    %130 = vmatpush1.msra.mxu0 0.0
    %131 = vmatprep.subr.mxu0 0.0
    %132 = vmatpush1.msra.mxu0 0.0
    %133 = vmatprep.subr.mxu0 0.0
    %134 = vmatpush1.msra.mxu0 0.0
    %135 = vmatprep.subr.mxu0 0.0
    %136 = vmatpush1.msra.mxu0 0.0
    %137 = vmatprep.subr.mxu0 0.0
    %138 = vmatpush1.msra.mxu0 0.0
    %139 = vmatprep.subr.mxu0 0.0
    %140 = vmatpush1.msra.mxu0 0.0
    %141 = vmatprep.subr.mxu0 0.0
    %142 = vmatpush1.msra.mxu0 0.0
    %143 = vmatprep.subr.mxu0 0.0
    %144 = vmatpush1.msra.mxu0 0.0
    %145 = vmatprep.subr.mxu0 0.0
    %146 = vmatpush1.msra.mxu0 0.0
    %147 = vmatprep.subr.mxu0 0.0
    %148 = vmatpush1.msra.mxu0 0.0
    %149 = vmatprep.subr.mxu0 0.0
    %150 = vmatpush1.msra.mxu0 0.0
    %151 = vmatprep.subr.mxu0 0.0
    %152 = vmatpush1.msra.mxu0 0.0
    %153 = vmatprep.subr.mxu0 0.0
    %154 = vmatpush1.msra.mxu0 0.0
    %155 = vmatprep.subr.mxu0 0.0
    %156 = vmatpush1.msra.mxu0 0.0
    %157 = vmatprep.subr.mxu0 0.0
    %158 = vmatpush1.msra.mxu0 0.0
    %159 = vmatprep.subr.mxu0 0.0
    %160 = vmatpush1.msra.mxu0 0.0
    %161 = vmatprep.subr.mxu0 0.0
    %162 = vmatpush1.msra.mxu0 0.0
    %163 = vmatprep.subr.mxu0 0.0
    %164 = vmatpush1.msra.mxu0 0.0
    %165 = vmatprep.subr.mxu0 0.0
    %166 = vmatpush1.msra.mxu0 0.0
    %167 = vmatprep.subr.mxu0 0.0
    %168 = vmatpush1.msra.mxu0 0.0
    %169 = vmatprep.subr.mxu0 0.0
    %170 = vmatpush1.msra.mxu0 0.0
    %171 = vmatprep.subr.mxu0 0.0
    %172 = vmatpush1.msra.mxu0 0.0
    %173 = vmatprep.subr.mxu0 0.0
    %174 = vmatpush1.msra.mxu0 0.0
    %175 = vmatprep.subr.mxu0 0.0
    %176 = vmatpush1.msra.mxu0 0.0
    %177 = vmatprep.subr.mxu0 0.0
    %178 = vmatpush1.msra.mxu0 0.0
    %179 = vmatprep.subr.mxu0 0.0
    %180 = vmatpush1.msra.mxu0 0.0
    %181 = vmatprep.subr.mxu0 0.0
    %182 = vmatpush1.msra.mxu0 0.0
    %183 = vmatprep.subr.mxu0 0.0
    %184 = vmatpush1.msra.mxu0 0.0
    %185 = vmatprep.mubr.f32.mxu0 0.0
    %186 = vmatmul.mubr.f32.gmra.mrb[0].mxu0 %v119
    %v187 = vpop.f32.mrb[0].mxu0
    %v188 = vadd.f32 %v115, %v187
    %v189 = vpop.f32.mrb[0].mxu0
    %190 = vdwg.mxu0
    %191 = vst.msk [vmem:[#allocation2] sm:$0xff] %vm31, %v188
    // Predicated region
    $region22: #{stn_nn_forward.1} parent=1 // pred_check
      _
    $region23: #{stn_nn_forward.1} parent=1 // pred_check_branch
      %193 = sbr.rel (0) target = $region25
    $region24: #{stn_nn_forward.1} parent=1 // pred_region
      %s195 = ssub.s32 128, 128
      %196 = vsyncadd [#allocation3], %s195
      %s198 = sshll.u32 [#allocation2], 4
      %s199 = int_to_ptr.vmem [resolvable:$true] %s198
      %201 = dma.vmem_to_hbm [thread:$0]  %s199, 128, %s5, [#allocation3]
    $region25: #{stn_nn_forward.1} parent=1 // pred_fallthru
      _
    // Predicated region
    $region26: #{stn_nn_forward.1} parent=1 // pred_check
      _
    $region27: #{stn_nn_forward.1} parent=1 // pred_check_branch
      %203 = sbr.rel (0) target = $region29
    $region28: #{stn_nn_forward.1} parent=1 // pred_region
      %204 = dma.done [#allocation3], 128
    $region29: #{stn_nn_forward.1} parent=1 // pred_fallthru
      _
    %205 = vsyncpa [#allocation3], 1

</llo_original>
